<compile_context>
chip_gen: v5e
topology: v5e:2x2
jax: 0.10.0
libtpu: 0.0.40
codegen_flags: <defaults>
</compile_context>

<pallas_src>
import functools

import jax
import jax.numpy as jnp
from jax import lax
from jax.experimental import pallas as pl
from jax.experimental.pallas import tpu as pltpu


# ---------------------------------------------------------------------------
# Generation-aware sizing helpers
# ---------------------------------------------------------------------------

def _vmem_params():
    """Per-generation (VMEM ceiling, per-block budget, min grid steps)."""
    try:
        vmem_cap = int(pltpu.get_tpu_info().vmem_capacity_bytes)
    except Exception:  # conservative fallback if the query is unavailable
        vmem_cap = 64 << 20
    # v7x exposes ~64 MiB per TensorCore (2 TCs/chip); v5e/v6e expose 128 MiB
    # on a single TC.  Require >=2 grid steps only where there are 2 cores.
    is_v7x_like = vmem_cap < (100 << 20)
    min_grid = 2 if is_v7x_like else 1
    vmem_ceiling = max(int(0.8 * vmem_cap), 16 << 20)
    # 2 input + 2 output pipelined buffers per block + ~6 MiB for weights,
    # gate scratch and compiler slack.
    block_budget = max(2 << 20, (vmem_ceiling - (6 << 20)) // 4)
    return vmem_ceiling, block_budget, min_grid


def _pick_tb(B, per_elem_bytes, budget, min_grid):
    """Largest TB dividing B with one block under budget and >= min_grid grid
    steps.  Returns 0 when even a single batch element exceeds the budget."""
    best = 0
    for tb in range(1, B + 1):
        if B % tb:
            continue
        if tb * per_elem_bytes > budget:
            continue
        if (B // tb) < min(min_grid, B):
            continue
        best = tb
    return best


def _pick_hw_tile(HW, max_elems):
    """Largest divisor of HW that is <= max_elems, preferring multiples of 128
    (unmasked, full-lane-width loads/stores)."""
    divs = [d for d in range(1, HW + 1) if HW % d == 0 and d <= max_elems]
    if not divs:
        return HW
    lane_divs = [d for d in divs if d % 128 == 0]
    return max(lane_divs) if lane_divs else max(divs)


# ---------------------------------------------------------------------------
# Kernels
# ---------------------------------------------------------------------------

def _se_kernel(x_ref, w1t_ref, w2t_ref, o_ref, gate_ref, *,
               inv_hw, chunk, n_chunks):
    # x_ref block: (TB, C, H*W), lane axis = flattened spatial dims.
    tb, c, hw = x_ref.shape

    # ---- squeeze: chunked f32 accumulation over the lane axis (keeps the
    # f32 footprint at (TB, C), never an f32 copy of the whole block). ----
    if n_chunks == 1:
        s = jnp.sum(x_ref[...].astype(jnp.float32), axis=-1)           # (TB, C)
    else:
        def body(i, acc):
            start = pl.multiple_of(i * chunk, chunk)
            xc = x_ref[:, :, pl.ds(start, chunk)]
            return acc + jnp.sum(xc.astype(jnp.float32), axis=-1)
        s = lax.fori_loop(0, n_chunks, body,
                          jnp.zeros((tb, c), jnp.float32),
                          unroll=n_chunks <= 8)
    s = s * jnp.float32(inv_hw)                                        # (TB, C)

    # ---- excitation: fc1 (no bias) + ReLU; weights stay in activation dtype,
    # f32 accumulate on the MXU. ----
    h = jnp.maximum(
        jnp.dot(s.astype(w1t_ref.dtype), w1t_ref[...],
                preferred_element_type=jnp.float32), 0.0)              # (TB, Cr)

    # ---- fc2 (no bias) + sigmoid ----
    g = jax.nn.sigmoid(
        jnp.dot(h.astype(w2t_ref.dtype), w2t_ref[...],
                preferred_element_type=jnp.float32))                   # (TB, C)

    # ---- rescale: stash the gate in a tiny VMEM scratch and re-read it with
    # a lane-broadcast so the multiply pass is pure VPU + vld. ----
    gate_ref[...] = g.astype(gate_ref.dtype)[:, :, None]               # (TB,C,1)
    o_ref[...] = (x_ref[...] * gate_ref[...]).astype(o_ref.dtype)


def _se_gate_kernel(x_ref, w1t_ref, w2t_ref, g_ref, acc_ref, *, inv_hw):
    # Fallback pass 1: x_ref block (1, C, tHW); accumulate the spatial sum
    # across the HW grid axis, compute the gate at the last step.
    t = pl.program_id(1)

    @pl.when(t == 0)
    def _():
        acc_ref[...] = jnp.zeros_like(acc_ref)

    acc_ref[...] += jnp.sum(x_ref[...].astype(jnp.float32), axis=-1)   # (1, C)

    @pl.when(t == pl.num_programs(1) - 1)
    def _():
        s = acc_ref[...] * jnp.float32(inv_hw)
        h = jnp.maximum(
            jnp.dot(s.astype(w1t_ref.dtype), w1t_ref[...],
                    preferred_element_type=jnp.float32), 0.0)
        g = jax.nn.sigmoid(
            jnp.dot(h.astype(w2t_ref.dtype), w2t_ref[...],
                    preferred_element_type=jnp.float32))
        g_ref[...] = g.astype(g_ref.dtype)


def _se_rescale_kernel(g_ref, x_ref, o_ref):
    # Fallback pass 2: lane-tiled rescale.  g_ref: (1, C); x/o: (1, C, tHW).
    o_ref[...] = (x_ref[...] * g_ref[...][:, :, None]).astype(o_ref.dtype)


# ---------------------------------------------------------------------------
# Wrapper
# ---------------------------------------------------------------------------

def se_layer(x, w1, w2, *, donate_x=False):
    """x: (B, C, H, W); w1: (C//r, C); w2: (C, C//r). Returns (B, C, H, W)."""
    B, C, H, W = x.shape
    Cr = w1.shape[0]
    assert w1.shape == (Cr, C) and w2.shape == (C, Cr)
    HW = H * W
    itemsize = jnp.dtype(x.dtype).itemsize

    vmem_ceiling, block_budget, min_grid = _vmem_params()

    # Lane-dense layout: free metadata reshape for contiguous NCHW.
    x2 = x.reshape(B, C, HW)
    # Hoist transpose out of the kernel; keep weights in the activation dtype
    # (bf16-native MXU; f32 accumulation via preferred_element_type).
    w1t = w1.T.astype(x.dtype)   # (C, Cr)
    w2t = w2.T.astype(x.dtype)   # (Cr, C)
    w_bytes = 2 * C * Cr * itemsize
    inv_hw = 1.0 / HW

    per_elem_bytes = C * HW * itemsize
    TB = _pick_tb(B, per_elem_bytes, block_budget, min_grid)

    if TB > 0:
        # ----- single fused kernel: whole (TB, C, HW) blocks in VMEM -----
        block_bytes = TB * per_elem_bytes
        gate_bytes = TB * C * itemsize
        vmem_limit = int(min(
            vmem_ceiling,
            max(16 << 20, 4 * block_bytes + 4 * w_bytes + gate_bytes + (4 << 20))))

        chunk = _pick_hw_tile(HW, 2048)
        if chunk != HW and chunk % 128 != 0:
            chunk = HW                 # avoid unaligned dynamic lane slices
        n_chunks = HW // chunk

        cost = pl.CostEstimate(
            flops=2 * B * C * HW + 4 * B * C * Cr,
            transcendentals=B * C,                         # sigmoid
            bytes_accessed=2 * B * C * HW * itemsize + 2 * w_bytes,
        )
        # NOTE: pipeline_mode=pl.Buffered(3) on the x in_spec is a possible
        # follow-up on v5e/v6e if an xprof trace shows exposed per-step DMA
        # gaps; it is intentionally not enabled by default (v7x VMEM budget).
        kernel = functools.partial(_se_kernel, inv_hw=inv_hw,
                                   chunk=chunk, n_chunks=n_chunks)
        out2 = pl.pallas_call(
            kernel,
            out_shape=jax.ShapeDtypeStruct((B, C, HW), x.dtype),
            grid_spec=pltpu.PrefetchScalarGridSpec(
                num_scalar_prefetch=0,
                grid=(B // TB,),
                in_specs=[
                    pl.BlockSpec((TB, C, HW), lambda b: (b, 0, 0)),
                    pl.BlockSpec((C, Cr), lambda b: (0, 0)),
                    pl.BlockSpec((Cr, C), lambda b: (0, 0)),
                ],
                out_specs=pl.BlockSpec((TB, C, HW), lambda b: (b, 0, 0)),
                scratch_shapes=[pltpu.VMEM((TB, C, 1), x.dtype)],
            ),
            compiler_params=pltpu.CompilerParams(
                dimension_semantics=("parallel",),
                vmem_limit_bytes=vmem_limit,
            ),
            cost_estimate=cost,
            input_output_aliases=({0: 0} if donate_x else {}),
        )(x2, w1t, w2t)
        return out2.reshape(B, C, H, W)

    # ----- fallback: a single batch element does not fit the block budget
    # (e.g. large C*H*W on v7x).  Two lane-tiled streaming kernels:
    #   1) pool + FCs -> per-(b, c) gate,  2) rescale x by the gate. -----
    tHW = _pick_hw_tile(HW, max(1, block_budget // (C * itemsize)))
    n_hw = HW // tHW
    tile_bytes = C * tHW * itemsize

    gate_vmem = int(min(vmem_ceiling,
                        max(16 << 20, 2 * tile_bytes + 4 * w_bytes + (4 << 20))))
    gate_cost = pl.CostEstimate(
        flops=B * C * HW + 4 * B * C * Cr,
        transcendentals=B * C,
        bytes_accessed=B * C * HW * itemsize + 2 * w_bytes + B * C * itemsize,
    )
    gate = pl.pallas_call(
        functools.partial(_se_gate_kernel, inv_hw=inv_hw),
        out_shape=jax.ShapeDtypeStruct((B, C), x.dtype),
        grid_spec=pltpu.PrefetchScalarGridSpec(
            num_scalar_prefetch=0,
            grid=(B, n_hw),
            in_specs=[
                pl.BlockSpec((1, C, tHW), lambda b, t: (b, 0, t)),
                pl.BlockSpec((C, Cr), lambda b, t: (0, 0)),
                pl.BlockSpec((Cr, C), lambda b, t: (0, 0)),
            ],
            out_specs=pl.BlockSpec((1, C), lambda b, t: (b, 0)),
            scratch_shapes=[pltpu.VMEM((1, C), jnp.float32)],
        ),
        compiler_params=pltpu.CompilerParams(
            dimension_semantics=("parallel", "arbitrary"),
            vmem_limit_bytes=gate_vmem,
        ),
        cost_estimate=gate_cost,
    )(x2, w1t, w2t)

    rescale_vmem = int(min(vmem_ceiling,
                           max(16 << 20, 4 * tile_bytes + (4 << 20))))
    rescale_cost = pl.CostEstimate(
        flops=B * C * HW,
        transcendentals=0,
        bytes_accessed=2 * B * C * HW * itemsize + B * C * itemsize,
    )
    out2 = pl.pallas_call(
        _se_rescale_kernel,
        out_shape=jax.ShapeDtypeStruct((B, C, HW), x.dtype),
        grid_spec=pltpu.PrefetchScalarGridSpec(
            num_scalar_prefetch=0,
            grid=(B, n_hw),
            in_specs=[
                pl.BlockSpec((1, C), lambda b, t: (b, 0)),
                pl.BlockSpec((1, C, tHW), lambda b, t: (b, 0, t)),
            ],
            out_specs=pl.BlockSpec((1, C, tHW), lambda b, t: (b, 0, t)),
        ),
        compiler_params=pltpu.CompilerParams(
            dimension_semantics=("parallel", "parallel"),
            vmem_limit_bytes=rescale_vmem,
        ),
        cost_estimate=rescale_cost,
        input_output_aliases=({1: 0} if donate_x else {}),
    )(gate, x2)
    return out2.reshape(B, C, H, W)


def se_layer_ref(x, w1, w2):
    """Pure-JAX reference matching the PyTorch forward."""
    s = jnp.mean(x, axis=(2, 3))                    # (B, C)
    h = jnp.maximum(s @ w1.T, 0.0)                  # (B, C//r)
    g = jax.nn.sigmoid(h @ w2.T)                    # (B, C)
    return x * g[:, :, None, None]


if __name__ == "__main__":
    # Deterministic example consistent with SELayer(channel=64, reduction=4).
    B, C, H, W = 2, 64, 16, 16
    reduction = 4
    Cr = C // reduction

    key = jax.random.PRNGKey(0)
    kx, k1, k2 = jax.random.split(key, 3)

    x = jax.random.normal(kx, (B, C, H, W), dtype=jnp.float32)
    # Deterministic synthetic "Linear" weights (fan-in scaled).
    w1 = jax.random.normal(k1, (Cr, C), dtype=jnp.float32) / jnp.sqrt(C)
    w2 = jax.random.normal(k2, (C, Cr), dtype=jnp.float32) / jnp.sqrt(Cr)

    out = se_layer(x, w1, w2)
    out = jax.block_until_ready(out)

    ref = se_layer_ref(x, w1, w2)
    assert out.shape == (B, C, H, W)
    assert jnp.allclose(out, ref, atol=1e-5, rtol=1e-5), "mismatch vs reference"

    print("KERNEL_OK")
</pallas_src>

<mosaic_0001>
module attributes {stable_mosaic.version = 11 : i64} {
  func.func @_se_kernel(%arg0: i32, %arg1: memref<1x64x256xf32, #tpu.memory_space<vmem>>, %arg2: memref<64x16xf32, #tpu.memory_space<vmem>>, %arg3: memref<16x64xf32, #tpu.memory_space<vmem>>, %arg4: memref<1x64x256xf32, #tpu.memory_space<vmem>>, %arg5: memref<1x64x1xf32, #tpu.memory_space<vmem>>) attributes {dimension_semantics = [#tpu.dimension_semantics<parallel>], iteration_bounds = array<i64: 2>, scalar_prefetch = 0 : i64, scratch_operands = 1 : i64, tpu.core_type = #tpu.core_type<tc>, window_params = [{transform_indices = @transform_0, window_bounds = array<i64: 1, 64, 256>}, {pipeline_mode = #tpu.pipeline_mode<synchronous>, transform_indices = @transform_1, window_bounds = array<i64: 64, 16>}, {pipeline_mode = #tpu.pipeline_mode<synchronous>, transform_indices = @transform_2, window_bounds = array<i64: 16, 64>}, {transform_indices = @transform_3, window_bounds = array<i64: 1, 64, 256>}]} {
    %c0 = arith.constant 0 : index
    %c0_0 = arith.constant 0 : index
    %c0_1 = arith.constant 0 : index
    %0 = vector.load %arg1[%c0, %c0_0, %c0_1] : memref<1x64x256xf32, #tpu.memory_space<vmem>>, vector<1x64x256xf32>
    %cst = arith.constant dense<0.000000e+00> : vector<1x64xf32>
    %1 = vector.multi_reduction <add>, %0, %cst [2] : vector<1x64x256xf32> to vector<1x64xf32>
    %cst_2 = arith.constant 3.906250e-03 : f32
    %2 = vector.broadcast %cst_2 : f32 to vector<1x64xf32>
    %3 = arith.mulf %1, %2 : vector<1x64xf32>
    %c0_3 = arith.constant 0 : index
    %c0_4 = arith.constant 0 : index
    %4 = vector.load %arg2[%c0_3, %c0_4] : memref<64x16xf32, #tpu.memory_space<vmem>>, vector<64x16xf32>
    %cst_5 = arith.constant dense<0.000000e+00> : vector<1x16xf32>
    %5 = tpu.matmul %3, %4, %cst_5 {dimension_numbers = #tpu.dot_dimension_numbers<[1], [0], [0], [1], [0, 0, 1, 1], [], []>} : vector<1x64xf32>, vector<64x16xf32>, vector<1x16xf32> -> vector<1x16xf32>
    %cst_6 = arith.constant 0.000000e+00 : f32
    %6 = vector.broadcast %cst_6 : f32 to vector<1x16xf32>
    %7 = arith.maximumf %5, %6 : vector<1x16xf32>
    %c0_7 = arith.constant 0 : index
    %c0_8 = arith.constant 0 : index
    %8 = vector.load %arg3[%c0_7, %c0_8] : memref<16x64xf32, #tpu.memory_space<vmem>>, vector<16x64xf32>
    %cst_9 = arith.constant dense<0.000000e+00> : vector<1x64xf32>
    %9 = tpu.matmul %7, %8, %cst_9 {dimension_numbers = #tpu.dot_dimension_numbers<[1], [0], [0], [1], [0, 0, 1, 1], [], []>} : vector<1x16xf32>, vector<16x64xf32>, vector<1x64xf32> -> vector<1x64xf32>
    %10 = arith.negf %9 : vector<1x64xf32>
    %11 = math.exp %10 : vector<1x64xf32>
    %cst_10 = arith.constant 1.000000e+00 : f32
    %12 = vector.broadcast %cst_10 : f32 to vector<1x64xf32>
    %13 = arith.addf %12, %11 : vector<1x64xf32>
    %14 = arith.divf %12, %13 : vector<1x64xf32>
    %15 = vector.shape_cast %14 : vector<1x64xf32> to vector<1x64x1xf32>
    %c0_11 = arith.constant 0 : index
    %c0_12 = arith.constant 0 : index
    %c0_13 = arith.constant 0 : index
    %16 = vector.load %arg5[%c0_11, %c0_12, %c0_13] : memref<1x64x1xf32, #tpu.memory_space<vmem>>, vector<1x64x1xf32>
    tpu.vector_store %arg5[%c0_11, %c0_12, %c0_13], %15 {strides = array<i32>} : memref<1x64x1xf32, #tpu.memory_space<vmem>>, vector<1x64x1xf32>,
    %c0_14 = arith.constant 0 : index
    %c0_15 = arith.constant 0 : index
    %c0_16 = arith.constant 0 : index
    %17 = vector.load %arg1[%c0_14, %c0_15, %c0_16] : memref<1x64x256xf32, #tpu.memory_space<vmem>>, vector<1x64x256xf32>
    %c0_17 = arith.constant 0 : index
    %c0_18 = arith.constant 0 : index
    %c0_19 = arith.constant 0 : index
    %18 = vector.load %arg5[%c0_17, %c0_18, %c0_19] : memref<1x64x1xf32, #tpu.memory_space<vmem>>, vector<1x64x1xf32>
    %19 = vector.broadcast %18 : vector<1x64x1xf32> to vector<1x64x256xf32>
    %20 = arith.mulf %17, %19 : vector<1x64x256xf32>
    %c0_20 = arith.constant 0 : index
    %c0_21 = arith.constant 0 : index
    %c0_22 = arith.constant 0 : index
    %21 = vector.load %arg4[%c0_20, %c0_21, %c0_22] : memref<1x64x256xf32, #tpu.memory_space<vmem>>, vector<1x64x256xf32>
    tpu.vector_store %arg4[%c0_20, %c0_21, %c0_22], %20 {strides = array<i32>} : memref<1x64x256xf32, #tpu.memory_space<vmem>>, vector<1x64x256xf32>,
    return
  }
  func.func @transform_0(%arg0: i32) -> (i32, i32, i32) {
    %c0_i32 = arith.constant 0 : i32
    %c0_i32_0 = arith.constant 0 : i32
    %c0_i32_1 = arith.constant 0 : i32
    return %arg0, %c0_i32, %c0_i32_0 : i32, i32, i32
  }
  func.func @transform_1(%arg0: i32) -> (i32, i32) {
    %c0_i32 = arith.constant 0 : i32
    %c0_i32_0 = arith.constant 0 : i32
    %c0_i32_1 = arith.constant 0 : i32
    return %c0_i32, %c0_i32_0 : i32, i32
  }
  func.func @transform_2(%arg0: i32) -> (i32, i32) {
    %c0_i32 = arith.constant 0 : i32
    %c0_i32_0 = arith.constant 0 : i32
    %c0_i32_1 = arith.constant 0 : i32
    return %c0_i32, %c0_i32_0 : i32, i32
  }
  func.func @transform_3(%arg0: i32) -> (i32, i32, i32) {
    %c0_i32 = arith.constant 0 : i32
    %c0_i32_0 = arith.constant 0 : i32
    %c0_i32_1 = arith.constant 0 : i32
    return %arg0, %c0_i32, %c0_i32_0 : i32, i32, i32
  }
}

</mosaic_0001>

<llo_original>
// kernel: tpu_custom_call.1
$region0: #{tpu_custom_call.1}
  #allocation0 [shape = 'u32[]', space=smem, size = 0x4, offset = 0x4, fixed_abs, tag = 'smem constant byte address 0x4 - core index']
  #allocation1 [shape = 'u32[72,128]{1,0:T(1,128)}', space=vmem, size = 0x9000, scoped, tag = 'internal scratch']
  #allocation2 [shape = 'f32[1,64,1]{2,1,0:T(8,128)}', space=vmem, size = 0x8000, scoped, tag = 'scratch operand']
  %s0 = inlined_call_operand.hbm [shape: f32[2,64,256], index: 0, kind: input, shape index: {}]
  %s1 = inlined_call_operand.vmem [shape: f32[64,16], index: 1, kind: input, shape index: {}]
  %s2 = inlined_call_operand.vmem [shape: f32[16,64], index: 2, kind: input, shape index: {}]
  %s3 = inlined_call_operand.hbm [shape: f32[2,64,256], index: 3, kind: output, shape index: {}]
  %s4 = sld [smem:[#allocation0]]
  $region49: #{tpu_custom_call.1} parent=0
    _
  %s6 = ssub.s32 1, %s4
  %s7 = scalar_select 0, %s6, %s4
  $region1: #{tpu_custom_call.1} parent=0
    #allocation3 [shape = 'u8[131072]{0}', space=vmem, size = 0x20000, scoped, tag = 'input window, operand 0']
    #allocation4 [shape = 's32[2]{0}', space=sflag, size = 0x8, scoped, tag = 'scoped memory for tpu_custom_call.1']
    #allocation5 [shape = 's32[2]{0}', space=sflag, size = 0x8, scoped, tag = 'scoped memory for tpu_custom_call.1']
    #allocation6 [shape = 'u8[131072]{0}', space=vmem, size = 0x20000, scoped, tag = 'output window, operand 0']
    %8 = vsyncpa [#allocation4], 0
    %s9 = scalar_lea.sflag [#allocation4], 1
    %10 = vsyncpa %s9, 0
    %11 = vsyncpa [#allocation5], 0
    %s12 = scalar_lea.sflag [#allocation5], 1
    %13 = vsyncpa %s12, 0
    loop: start=0, step=1, limit=4
    $region2: #{tpu_custom_call.1} parent=1 // loop_pre_header
      _
    $region3: #{tpu_custom_call.1} parent=1 // loop_header
      %s15 = sphi 0, %s19
      %p16 = scmp.ge.s32.totalorder %s15, 4
      %s25 = sphi 0, %s27
      %s28 = sphi 0, %s25
      %s29 = sphi 0, %s28
      %s45 = sphi 0, %s29
      %s49 = sphi 0, %s49
      %s51 = sphi 0, %s49
      %s52 = sphi 0, %s51
      %s66 = sphi 0, %s52
      %s70 = sphi 0, %s70
      %s72 = sphi 0, %s70
      %s73 = sphi 0, %s72
      %s87 = sphi 0, %s73
      %s93 = sphi 0, %s95
      %s96 = sphi 0, %s93
      %s97 = sphi 0, %s96
      %s113 = sphi 0, %s97
    $region4: #{tpu_custom_call.1} parent=1 // loop_header_branch
      %18 = sbr.rel (%p16) target = $region8
    $region5: #{tpu_custom_call.1} parent=1 // loop_body
      %s20 = ssub.s32 %s15, 1
      %s21 = ssub.s32 %s15, 2
      %s22 = sadd.s32 %s15, 1
      %s23 = ssub.s32 %s15, %s22
      %p24 = scmp.eq.s32.totalorder %s23, 0
      %s26 = sadd.s32 %s25, 1
      %s27 = scalar_select %p24, %s25, %s26
      %p30 = pneg %p24
      %p31 = scmp.eq.s32.totalorder %s15, 1
      %p32 = por %p30, %p31
      %p33 = scmp.ne.s32.totalorder %s25, %s28
      %p34 = scmp.eq.s32.totalorder %s15, 0
      %p35 = por %p33, %p34
      %p36 = scmp.ne.s32.totalorder %s25, %s28
      %p37 = scmp.eq.s32.totalorder %s20, 1
      %p38 = por %p36, %p37
      %p39 = scmp.ne.s32.totalorder %s28, %s29
      %p40 = scmp.eq.s32.totalorder %s20, 0
      %p41 = por %p39, %p40
      %p42 = scmp.ne.s32.totalorder %s28, %s29
      %p43 = scmp.eq.s32.totalorder %s21, 1
      %p44 = por %p42, %p43
      %p46 = scmp.ne.s32.totalorder %s29, %s45
      %p47 = scmp.eq.s32.totalorder %s21, 0
      %p48 = por %p46, %p47
      %s50 = sadd.s32 %s49, 1
      %p53 = scmp.eq.s32.totalorder %s15, 1
      %p54 = scmp.ne.s32.totalorder %s49, %s51
      %p55 = scmp.eq.s32.totalorder %s15, 0
      %p56 = por %p54, %p55
      %p57 = scmp.ne.s32.totalorder %s49, %s51
      %p58 = scmp.eq.s32.totalorder %s20, 1
      %p59 = por %p57, %p58
      %p60 = scmp.ne.s32.totalorder %s51, %s52
      %p61 = scmp.eq.s32.totalorder %s20, 0
      %p62 = por %p60, %p61
      %p63 = scmp.ne.s32.totalorder %s51, %s52
      %p64 = scmp.eq.s32.totalorder %s21, 1
      %p65 = por %p63, %p64
      %p67 = scmp.ne.s32.totalorder %s52, %s66
      %p68 = scmp.eq.s32.totalorder %s21, 0
      %p69 = por %p67, %p68
      %s71 = sadd.s32 %s70, 1
      %p74 = scmp.eq.s32.totalorder %s15, 1
      %p75 = scmp.ne.s32.totalorder %s70, %s72
      %p76 = scmp.eq.s32.totalorder %s15, 0
      %p77 = por %p75, %p76
      %p78 = scmp.ne.s32.totalorder %s70, %s72
      %p79 = scmp.eq.s32.totalorder %s20, 1
      %p80 = por %p78, %p79
      %p81 = scmp.ne.s32.totalorder %s72, %s73
      %p82 = scmp.eq.s32.totalorder %s20, 0
      %p83 = por %p81, %p82
      %p84 = scmp.ne.s32.totalorder %s72, %s73
      %p85 = scmp.eq.s32.totalorder %s21, 1
      %p86 = por %p84, %p85
      %p88 = scmp.ne.s32.totalorder %s73, %s87
      %p89 = scmp.eq.s32.totalorder %s21, 0
      %p90 = por %p88, %p89
      %s91 = ssub.s32 %s15, %s22
      %p92 = scmp.eq.s32.totalorder %s91, 0
      %s94 = sadd.s32 %s93, 1
      %s95 = scalar_select %p92, %s93, %s94
      %p98 = pneg %p92
      %p99 = scmp.eq.s32.totalorder %s15, 1
      %p100 = por %p98, %p99
      %p101 = scmp.ne.s32.totalorder %s93, %s96
      %p102 = scmp.eq.s32.totalorder %s15, 0
      %p103 = por %p101, %p102
      %p104 = scmp.ne.s32.totalorder %s93, %s96
      %p105 = scmp.eq.s32.totalorder %s20, 1
      %p106 = por %p104, %p105
      %p107 = scmp.ne.s32.totalorder %s96, %s97
      %p108 = scmp.eq.s32.totalorder %s20, 0
      %p109 = por %p107, %p108
      %p110 = scmp.ne.s32.totalorder %s96, %s97
      %p111 = scmp.eq.s32.totalorder %s21, 1
      %p112 = por %p110, %p111
      %p114 = scmp.ne.s32.totalorder %s97, %s113
      %p115 = scmp.eq.s32.totalorder %s21, 0
      %p116 = por %p114, %p115
      %p117 = scmp.le.s32.totalorder 1, %s15
      %p118 = scmp.lt.s32.totalorder %s15, 3
      %p119 = pnand %p117, %p118
      %p120 = pneg %p119
      // Predicated region
      $region9: #{tpu_custom_call.1} parent=5 // pred_check
        _
      $region10: #{tpu_custom_call.1} parent=5 // pred_check_branch
        %122 = sbr.rel (%p119) target = $region12
      $region11: #{tpu_custom_call.1} parent=5 // pred_region
        %s123 = ssub.s32 %s15, 1
        // Predicated region
        $region13: #{tpu_custom_call.1} parent=11 // pred_check
          %p124 = pneg %p62
        $region14: #{tpu_custom_call.1} parent=11 // pred_check_branch
          %126 = sbr.rel (%p124) target = $region16
        $region15: #{tpu_custom_call.1} parent=11 // pred_region
          _
        $region16: #{tpu_custom_call.1} parent=11 // pred_fallthru
          _
        // Predicated region
        $region17: #{tpu_custom_call.1} parent=11 // pred_check
          %p127 = pneg %p83
        $region18: #{tpu_custom_call.1} parent=11 // pred_check_branch
          %129 = sbr.rel (%p127) target = $region20
        $region19: #{tpu_custom_call.1} parent=11 // pred_region
          _
        $region20: #{tpu_custom_call.1} parent=11 // pred_fallthru
          _
      $region12: #{tpu_custom_call.1} parent=5 // pred_fallthru
        _
      %p130 = scmp.lt.s32.totalorder %s15, 2
      // Predicated region
      $region21: #{tpu_custom_call.1} parent=5 // pred_check
        %p131 = pneg %p130
      $region22: #{tpu_custom_call.1} parent=5 // pred_check_branch
        %133 = sbr.rel (%p131) target = $region24
      $region23: #{tpu_custom_call.1} parent=5 // pred_region
        // Predicated region
        $region25: #{tpu_custom_call.1} parent=23 // pred_check
          %p134 = pneg %p35
        $region26: #{tpu_custom_call.1} parent=23 // pred_check_branch
          %136 = sbr.rel (%p134) target = $region28
        $region27: #{tpu_custom_call.1} parent=23 // pred_region
          %s137 = sand.u32 %s25, 1
          %s138 = scalar_lea.sflag [#allocation4], %s137
          %s139 = sand.u32 %s25, 1
          %s140 = smul.addr %s139, 128
          %s141 = scalar_lea.vmem [#allocation3], %s140
          %143 = vsyncadd %s138, 0
          %s144 = smul.addr %s15, 16
          %s145 = smul.addr %s144, 8
          %s146 = scalar_lea.hbm %s0, %s145
          %s147 = sshll.u32 %s146, 4
          %s148 = int_to_ptr.hbm [resolvable:$true] %s147
          %s149 = sshll.u32 %s141, 4
          %s150 = int_to_ptr.vmem [resolvable:$true] %s149
          %155 = dma.hbm_to_vmem [thread:$0]  %s148, 2048, %s150, %s138, 256, 256, 16
        $region28: #{tpu_custom_call.1} parent=23 // pred_fallthru
          _
      $region24: #{tpu_custom_call.1} parent=5 // pred_fallthru
        _
      %p156 = scmp.le.s32.totalorder 1, %s15
      %p157 = scmp.lt.s32.totalorder %s15, 3
      %p158 = pnand %p156, %p157
      %p159 = pneg %p158
      // Predicated region
      $region29: #{tpu_custom_call.1} parent=5 // pred_check
        _
      $region30: #{tpu_custom_call.1} parent=5 // pred_check_branch
        %161 = sbr.rel (%p158) target = $region32
      $region31: #{tpu_custom_call.1} parent=5 // pred_region
        %s162 = ssub.s32 %s15, 1
        %s163 = sand.u32 %s28, 1
        %s164 = scalar_lea.sflag [#allocation4], %s163
        %s165 = sand.u32 %s28, 1
        %s166 = smul.addr %s165, 128
        %s167 = scalar_lea.vmem [#allocation3], %s166
        // Predicated region
        $region33: #{tpu_custom_call.1} parent=31 // pred_check
          %p168 = pneg %p41
        $region34: #{tpu_custom_call.1} parent=31 // pred_check_branch
          %170 = sbr.rel (%p168) target = $region36
        $region35: #{tpu_custom_call.1} parent=31 // pred_region
          %172 = dma.done %s164, 2048
        $region36: #{tpu_custom_call.1} parent=31 // pred_fallthru
          _
        %s173 = sand.u32 %s28, 1
        %s174 = scalar_lea.sflag [#allocation4], %s173
        %s175 = sand.u32 %s28, 1
        %s176 = smul.addr %s175, 128
        %s177 = scalar_lea.vmem [#allocation3], %s176
        %p178 = pneg %p41
        %p179 = pneg %p38
        %p180 = pneg %p62
        %p181 = pneg %p59
        %p182 = pneg %p83
        %p183 = pneg %p80
        %p184 = pneg %p109
        %p185 = pneg %p106
        %s186 = sand.u32 %s96, 1
        %s187 = scalar_lea.sflag [#allocation5], %s186
        %s188 = sand.u32 %s96, 1
        %s189 = smul.addr %s188, 128
        %s190 = scalar_lea.vmem [#allocation6], %s189
        %v191 = vld [vmem:[%s167] sm:$0xff]
        %v192 = vld [vmem:[%s167 + $0x8] sm:$0xff]
        %v193 = vld [vmem:[%s167 + $0x10] sm:$0xff]
        %v194 = vld [vmem:[%s167 + $0x18] sm:$0xff]
        %v195 = vld [vmem:[%s167 + $0x20] sm:$0xff]
        %v196 = vld [vmem:[%s167 + $0x28] sm:$0xff]
        %v197 = vld [vmem:[%s167 + $0x30] sm:$0xff]
        %v198 = vld [vmem:[%s167 + $0x38] sm:$0xff]
        %v199 = vld [vmem:[%s167 + $0x40] sm:$0xff]
        %v200 = vld [vmem:[%s167 + $0x48] sm:$0xff]
        %v201 = vld [vmem:[%s167 + $0x50] sm:$0xff]
        %v202 = vld [vmem:[%s167 + $0x58] sm:$0xff]
        %v203 = vld [vmem:[%s167 + $0x60] sm:$0xff]
        %v204 = vld [vmem:[%s167 + $0x68] sm:$0xff]
        %v205 = vld [vmem:[%s167 + $0x70] sm:$0xff]
        %v206 = vld [vmem:[%s167 + $0x78] sm:$0xff]
        %v207 = vadd.f32 %v191, %v192
        %208 = vadd.xlane.f32.xlu0 %v207
        %v209 = vpop.xlane.xlu0 %208
        %v210 = vadd.f32 %v193, %v194
        %211 = vadd.xlane.f32.xlu0 %v210
        %v212 = vpop.xlane.xlu0 %211
        %v213 = vadd.f32 %v195, %v196
        %214 = vadd.xlane.f32.xlu0 %v213
        %v215 = vpop.xlane.xlu0 %214
        %v216 = vadd.f32 %v197, %v198
        %217 = vadd.xlane.f32.xlu0 %v216
        %v218 = vpop.xlane.xlu0 %217
        %v219 = vadd.f32 %v199, %v200
        %220 = vadd.xlane.f32.xlu0 %v219
        %v221 = vpop.xlane.xlu0 %220
        %v222 = vadd.f32 %v201, %v202
        %223 = vadd.xlane.f32.xlu0 %v222
        %v224 = vpop.xlane.xlu0 %223
        %v225 = vadd.f32 %v203, %v204
        %226 = vadd.xlane.f32.xlu0 %v225
        %v227 = vpop.xlane.xlu0 %226
        %v228 = vadd.f32 %v205, %v206
        %229 = vadd.xlane.f32.xlu0 %v228
        %v230 = vpop.xlane.xlu0 %229
        %v231 = vmul.f32 %v209, 0.00390625
        %v232 = vmul.f32 %v212, 0.00390625
        %v233 = vmul.f32 %v215, 0.00390625
        %v234 = vmul.f32 %v218, 0.00390625
        %v235 = vmul.f32 %v221, 0.00390625
        %v236 = vmul.f32 %v224, 0.00390625
        %v237 = vmul.f32 %v227, 0.00390625
        %v238 = vmul.f32 %v230, 0.00390625
        %v239 = vld [vmem:[%s1] sm:$0xff]
        %v240 = vld [vmem:[%s1 + $0x8] sm:$0xff]
        %v241 = vld [vmem:[%s1 + $0x10] sm:$0xff]
        %v242 = vld [vmem:[%s1 + $0x18] sm:$0xff]
        %v243 = vld [vmem:[%s1 + $0x20] sm:$0xff]
        %v244 = vld [vmem:[%s1 + $0x28] sm:$0xff]
        %v245 = vld [vmem:[%s1 + $0x30] sm:$0xff]
        %v246 = vld [vmem:[%s1 + $0x38] sm:$0xff]
        %v255 = vlaneseq
        %v256 = vand.u32 %v255, 127
        %v257 = vperm.slane %v231, %v256
        %v258 = vadd.s32 %v256, 4294967288
        %v259 = vperm.slane %v232, %v258
        %vm260 = vcmask 130112
        %v261 = vsel %vm260, %v259, %v257
        %v262 = vadd.s32 %v256, 4294967280
        %v263 = vperm.slane %v233, %v262
        %vm264 = vcmask 195712
        %v265 = vsel %vm264, %v263, %v261
        %v266 = vadd.s32 %v256, 4294967272
        %v267 = vperm.slane %v234, %v266
        %vm268 = vcmask 261312
        %v269 = vsel %vm268, %v267, %v265
        %v270 = vadd.s32 %v256, 4294967264
        %v271 = vperm.slane %v235, %v270
        %vm272 = vcmask 326912
        %v273 = vsel %vm272, %v271, %v269
        %v274 = vadd.s32 %v256, 4294967256
        %v275 = vperm.slane %v236, %v274
        %vm276 = vcmask 392512
        %v277 = vsel %vm276, %v275, %v273
        %v278 = vadd.s32 %v256, 4294967248
        %v279 = vperm.slane %v237, %v278
        %vm280 = vcmask 458112
        %v281 = vsel %vm280, %v279, %v277
        %v282 = vadd.s32 %v256, 4294967240
        %v283 = vperm.slane %v238, %v282
        %vm284 = vcmask 523712
        %v285 = vsel %vm284, %v283, %v281
        %vm286 = vcmask 523264
        %v287 = vsel %vm286, %v285, 0
        %289 = vmatpush.msra.mxu0 0.0
        %290 = vmatpush.msra.mxu0 0.0
        %291 = vmatpush.msra.mxu0 0.0
        %292 = vmatpush.msra.mxu0 0.0
        %293 = vmatpush.msra.mxu0 0.0
        %294 = vmatpush.msra.mxu0 0.0
        %295 = vmatpush.msra.mxu0 0.0
        %296 = vmatpush.msra.mxu0 0.0
        %297 = vmatpush.msra.mxu0 %v246
        %298 = vmatpush.msra.mxu0 %v245
        %299 = vmatpush.msra.mxu0 %v244
        %300 = vmatpush.msra.mxu0 %v243
        %301 = vmatpush.msra.mxu0 %v242
        %302 = vmatpush.msra.mxu0 %v241
        %303 = vmatpush.msra.mxu0 %v240
        %304 = vmatpush.msra.mxu0 %v239
        %305 = vmatmul.f32.gmra.mxu0 %v287
        %v306 = vpop.f32.mrf.mxu0
        %v307 = vadd.f32 0.0, %v306
        %308 = vdwg.mxu0
        %v309 = vmax.f32 %v307, 0.0
        %v310 = vld [vmem:[%s2] sm:$0xff]
        %v311 = vld [vmem:[%s2 + $0x8] sm:$0xff]
        %vm312 = vcmask 130048
        %v314 = vsel %vm312, %v309, 0
        %316 = vmatpush.msra.mxu0 0.0
        %317 = vmatpush.msra.mxu0 0.0
        %318 = vmatpush.msra.mxu0 0.0
        %319 = vmatpush.msra.mxu0 0.0
        %320 = vmatpush.msra.mxu0 0.0
        %321 = vmatpush.msra.mxu0 0.0
        %322 = vmatpush.msra.mxu0 0.0
        %323 = vmatpush.msra.mxu0 0.0
        %324 = vmatpush.msra.mxu0 0.0
        %325 = vmatpush.msra.mxu0 0.0
        %326 = vmatpush.msra.mxu0 0.0
        %327 = vmatpush.msra.mxu0 0.0
        %328 = vmatpush.msra.mxu0 0.0
        %329 = vmatpush.msra.mxu0 0.0
        %330 = vmatpush.msra.mxu0 %v311
        %331 = vmatpush.msra.mxu0 %v310
        %332 = vmatmul.f32.gmra.mxu0 %v314
        %v333 = vpop.f32.mrf.mxu0
        %v334 = vadd.f32 0.0, %v333
        %335 = vdwg.mxu0
        %v336 = vxor.u32 %v334, 2147483648
        %v337 = vmul.f32 %v336, 1.442695
        %v338 = vpow.pop %v337
        %v339 = vadd.f32 %v338, 1.0
        %v340 = vrcp.pop %v339
        %v341 = vmul.f32 %v339, %v340
        %v342 = vsub.f32 1.0, %v341
        %v343 = vmul.f32 %v340, %v342
        %v344 = vadd.f32 %v340, %v343
        %vm345 = vweird.f32 %v339
        %vm346 = vweird.f32 %v340
        %vm347 = vmor %vm345, %vm346
        %v348 = vsel %vm347, %v340, %v344
        %v349 = vand.u32 2147483647, %v339
        %vm350 = vcmp.eq.f32.partialorder %v349, 8.507059e+37
        %v351 = vand.u32 %v339, 2147483648
        %v352 = vor.u32 1.1754944e-38, %v351
        %v353 = vsel %vm350, %v352, %v348
        %v354 = vmul.f32 1.0, %v353
        %v355 = vperm.slane %v354, 0
        %v356 = vlaneseq
        %v357 = vshrl.u32 %v356, 7
        %359 = vset.pattern.permute.xlu0 %v357
        %360 = vperm.xlu0 %359, %v355
        %v361 = vpop.permute.xlu0 %360
        %v362 = vlaneseq
        %v363 = vshrl.u32 %v362, 7
        %v364 = vadd.s32 %v363, 8
        %365 = vset.pattern.permute.xlu0 %v364
        %366 = vperm.xlu0 %365, %v355
        %v367 = vpop.permute.xlu0 %366
        %v368 = vlaneseq
        %v369 = vshrl.u32 %v368, 7
        %v370 = vadd.s32 %v369, 16
        %371 = vset.pattern.permute.xlu0 %v370
        %372 = vperm.xlu0 %371, %v355
        %v373 = vpop.permute.xlu0 %372
        %v374 = vlaneseq
        %v375 = vshrl.u32 %v374, 7
        %v376 = vadd.s32 %v375, 24
        %377 = vset.pattern.permute.xlu0 %v376
        %378 = vperm.xlu0 %377, %v355
        %v379 = vpop.permute.xlu0 %378
        %v380 = vlaneseq
        %v381 = vshrl.u32 %v380, 7
        %v382 = vadd.s32 %v381, 32
        %383 = vset.pattern.permute.xlu0 %v382
        %384 = vperm.xlu0 %383, %v355
        %v385 = vpop.permute.xlu0 %384
        %v386 = vlaneseq
        %v387 = vshrl.u32 %v386, 7
        %v388 = vadd.s32 %v387, 40
        %389 = vset.pattern.permute.xlu0 %v388
        %390 = vperm.xlu0 %389, %v355
        %v391 = vpop.permute.xlu0 %390
        %v392 = vlaneseq
        %v393 = vshrl.u32 %v392, 7
        %v394 = vadd.s32 %v393, 48
        %395 = vset.pattern.permute.xlu0 %v394
        %396 = vperm.xlu0 %395, %v355
        %v397 = vpop.permute.xlu0 %396
        %v398 = vlaneseq
        %v399 = vshrl.u32 %v398, 7
        %v400 = vadd.s32 %v399, 56
        %401 = vset.pattern.permute.xlu0 %v400
        %402 = vperm.xlu0 %401, %v355
        %v403 = vpop.permute.xlu0 %402
        %vm404 = vcmask 7168
        %405 = vst.msk [vmem:[#allocation2] sm:$0xff] %vm404, %v361
        %406 = vst.msk [vmem:[#allocation2 + $0x8] sm:$0xff] %vm404, %v367
        %407 = vst.msk [vmem:[#allocation2 + $0x10] sm:$0xff] %vm404, %v373
        %408 = vst.msk [vmem:[#allocation2 + $0x18] sm:$0xff] %vm404, %v379
        %409 = vst.msk [vmem:[#allocation2 + $0x20] sm:$0xff] %vm404, %v385
        %410 = vst.msk [vmem:[#allocation2 + $0x28] sm:$0xff] %vm404, %v391
        %411 = vst.msk [vmem:[#allocation2 + $0x30] sm:$0xff] %vm404, %v397
        %412 = vst.msk [vmem:[#allocation2 + $0x38] sm:$0xff] %vm404, %v403
        %v413 = vld [vmem:[%s167] sm:$0xff]
        %v414 = vld [vmem:[%s167 + $0x8] sm:$0xff]
        %v415 = vld [vmem:[%s167 + $0x10] sm:$0xff]
        %v416 = vld [vmem:[%s167 + $0x18] sm:$0xff]
        %v417 = vld [vmem:[%s167 + $0x20] sm:$0xff]
        %v418 = vld [vmem:[%s167 + $0x28] sm:$0xff]
        %v419 = vld [vmem:[%s167 + $0x30] sm:$0xff]
        %v420 = vld [vmem:[%s167 + $0x38] sm:$0xff]
        %v421 = vld [vmem:[%s167 + $0x40] sm:$0xff]
        %v422 = vld [vmem:[%s167 + $0x48] sm:$0xff]
        %v423 = vld [vmem:[%s167 + $0x50] sm:$0xff]
        %v424 = vld [vmem:[%s167 + $0x58] sm:$0xff]
        %v425 = vld [vmem:[%s167 + $0x60] sm:$0xff]
        %v426 = vld [vmem:[%s167 + $0x68] sm:$0xff]
        %v427 = vld [vmem:[%s167 + $0x70] sm:$0xff]
        %v428 = vld [vmem:[%s167 + $0x78] sm:$0xff]
        %v429 = vld [vmem:[#allocation2] sm:$0xff]
        %v430 = vld [vmem:[#allocation2 + $0x8] sm:$0xff]
        %v431 = vld [vmem:[#allocation2 + $0x10] sm:$0xff]
        %v432 = vld [vmem:[#allocation2 + $0x18] sm:$0xff]
        %v433 = vld [vmem:[#allocation2 + $0x20] sm:$0xff]
        %v434 = vld [vmem:[#allocation2 + $0x28] sm:$0xff]
        %v435 = vld [vmem:[#allocation2 + $0x30] sm:$0xff]
        %v436 = vld [vmem:[#allocation2 + $0x38] sm:$0xff]
        %438 = vset.pattern.permute.xlu0 0
        %439 = vperm.xlu0 %438, %v429
        %v440 = vpop.permute.xlu0 %439
        %443 = vset.pattern.permute.xlu0 0
        %444 = vperm.xlu0 %443, %v430
        %v445 = vpop.permute.xlu0 %444
        %448 = vset.pattern.permute.xlu0 0
        %449 = vperm.xlu0 %448, %v431
        %v450 = vpop.permute.xlu0 %449
        %453 = vset.pattern.permute.xlu0 0
        %454 = vperm.xlu0 %453, %v432
        %v455 = vpop.permute.xlu0 %454
        %458 = vset.pattern.permute.xlu0 0
        %459 = vperm.xlu0 %458, %v433
        %v460 = vpop.permute.xlu0 %459
        %463 = vset.pattern.permute.xlu0 0
        %464 = vperm.xlu0 %463, %v434
        %v465 = vpop.permute.xlu0 %464
        %468 = vset.pattern.permute.xlu0 0
        %469 = vperm.xlu0 %468, %v435
        %v470 = vpop.permute.xlu0 %469
        %473 = vset.pattern.permute.xlu0 0
        %474 = vperm.xlu0 %473, %v436
        %v475 = vpop.permute.xlu0 %474
        %v477 = vmul.f32 %v413, %v440
        %v478 = vmul.f32 %v414, %v440
        %v479 = vmul.f32 %v415, %v445
        %v480 = vmul.f32 %v416, %v445
        %v481 = vmul.f32 %v417, %v450
        %v482 = vmul.f32 %v418, %v450
        %v483 = vmul.f32 %v419, %v455
        %v484 = vmul.f32 %v420, %v455
        %v485 = vmul.f32 %v421, %v460
        %v486 = vmul.f32 %v422, %v460
        %v487 = vmul.f32 %v423, %v465
        %v488 = vmul.f32 %v424, %v465
        %v489 = vmul.f32 %v425, %v470
        %v490 = vmul.f32 %v426, %v470
        %v491 = vmul.f32 %v427, %v475
        %v492 = vmul.f32 %v428, %v475
        %493 = vst [vmem:[%s190] sm:$0xff] %v477
        %494 = vst [vmem:[%s190 + $0x8] sm:$0xff] %v478
        %495 = vst [vmem:[%s190 + $0x10] sm:$0xff] %v479
        %496 = vst [vmem:[%s190 + $0x18] sm:$0xff] %v480
        %497 = vst [vmem:[%s190 + $0x20] sm:$0xff] %v481
        %498 = vst [vmem:[%s190 + $0x28] sm:$0xff] %v482
        %499 = vst [vmem:[%s190 + $0x30] sm:$0xff] %v483
        %500 = vst [vmem:[%s190 + $0x38] sm:$0xff] %v484
        %501 = vst [vmem:[%s190 + $0x40] sm:$0xff] %v485
        %502 = vst [vmem:[%s190 + $0x48] sm:$0xff] %v486
        %503 = vst [vmem:[%s190 + $0x50] sm:$0xff] %v487
        %504 = vst [vmem:[%s190 + $0x58] sm:$0xff] %v488
        %505 = vst [vmem:[%s190 + $0x60] sm:$0xff] %v489
        %506 = vst [vmem:[%s190 + $0x68] sm:$0xff] %v490
        %507 = vst [vmem:[%s190 + $0x70] sm:$0xff] %v491
        %508 = vst [vmem:[%s190 + $0x78] sm:$0xff] %v492
        %s509 = sand.u32 %s96, 1
        %s510 = scalar_lea.sflag [#allocation5], %s509
        %s511 = sand.u32 %s96, 1
        %s512 = smul.addr %s511, 128
        %s513 = scalar_lea.vmem [#allocation6], %s512
        // Predicated region
        $region37: #{tpu_custom_call.1} parent=31 // pred_check
          %p514 = pneg %p106
        $region38: #{tpu_custom_call.1} parent=31 // pred_check_branch
          %516 = sbr.rel (%p514) target = $region40
        $region39: #{tpu_custom_call.1} parent=31 // pred_region
          %518 = vsyncadd %s510, 0
          %s519 = smul.addr %s20, 16
          %s520 = smul.addr %s519, 8
          %s521 = scalar_lea.hbm %s3, %s520
          %s522 = sshll.u32 %s513, 4
          %s523 = int_to_ptr.vmem [resolvable:$true] %s522
          %s524 = sshll.u32 %s521, 4
          %s525 = int_to_ptr.hbm [resolvable:$true] %s524
          %530 = dma.vmem_to_hbm [thread:$0]  %s523, 2048, %s525, %s510, 256, 256, 16
        $region40: #{tpu_custom_call.1} parent=31 // pred_fallthru
          _
      $region32: #{tpu_custom_call.1} parent=5 // pred_fallthru
        _
      %p531 = scmp.le.s32.totalorder 2, %s15
      // Predicated region
      $region41: #{tpu_custom_call.1} parent=5 // pred_check
        %p532 = pneg %p531
      $region42: #{tpu_custom_call.1} parent=5 // pred_check_branch
        %534 = sbr.rel (%p532) target = $region44
      $region43: #{tpu_custom_call.1} parent=5 // pred_region
        %s535 = ssub.s32 %s15, 2
        // Predicated region
        $region45: #{tpu_custom_call.1} parent=43 // pred_check
          %p536 = pneg %p112
        $region46: #{tpu_custom_call.1} parent=43 // pred_check_branch
          %538 = sbr.rel (%p536) target = $region48
        $region47: #{tpu_custom_call.1} parent=43 // pred_region
          %s539 = sand.u32 %s97, 1
          %s540 = scalar_lea.sflag [#allocation5], %s539
          %s541 = sand.u32 %s97, 1
          %s542 = smul.addr %s541, 128
          %s543 = scalar_lea.vmem [#allocation6], %s542
          %545 = dma.done %s540, 2048
        $region48: #{tpu_custom_call.1} parent=43 // pred_fallthru
          _
      $region44: #{tpu_custom_call.1} parent=5 // pred_fallthru
        _
    $region6: #{tpu_custom_call.1} parent=1 // loop_footer
      %s19 = sadd.s32 1, %s15
    $region7: #{tpu_custom_call.1} parent=1 // loop_footer_branch
      %14 = sbr.rel target = $region3
    $region8: #{tpu_custom_call.1} parent=1 // loop_exit
      _
    %546 = vsyncpa [#allocation4], 1
    %s547 = scalar_lea.sflag [#allocation4], 1
    %548 = vsyncpa %s547, 1
    %549 = vsyncpa [#allocation5], 1
    %s550 = scalar_lea.sflag [#allocation5], 1
    %551 = vsyncpa %s550, 1

</llo_original>
